<compile_context>
chip_gen: v7x
topology: tpu7x:2x2x1
jax: 0.10.0
libtpu: 0.0.40
codegen_flags: <defaults>
</compile_context>

<pallas_src>
import functools
import math

import jax
import jax.numpy as jnp
from jax.experimental import pallas as pl
from jax.experimental.pallas import tpu as pltpu


def _round_up(x, m):
    return ((x + m - 1) // m) * m


def _semantic_attention_kernel(x_ref, w_ref, b_ref, a_ref, v_ref,
                               *, bt, n, h, hp, scale, scale_q):
    # x_ref : (bt*n, h)      -- bt batch elements flattened into the M dim
    # w_ref : (h, 3*hp)      -- fused, lane-padded [Wq | Wk | Wv]
    # b_ref : (1, 3*hp)      -- fused, lane-padded [bq | bk | bv]
    # a_ref : (bt, n, n)
    # v_ref : (bt, n, h)
    x = x_ref[...]

    # Single fused projection for Q, K, V on the MXU (fp32 accumulation).
    qkv = jnp.dot(x, w_ref[...], preferred_element_type=jnp.float32) + b_ref[...]

    # Tile-aligned slices (hp is a multiple of 128).  Padded columns of q/k
    # are exactly zero, so the contraction below is unaffected.
    q = qkv[:, 0:hp].reshape(bt, n, hp)
    k = qkv[:, hp:2 * hp].reshape(bt, n, hp)
    v = qkv[:, 2 * hp:2 * hp + h]

    if scale_q:                      # static choice: scale the smaller operand
        q = q * scale

    # Batched Q @ K^T without materializing a transpose: contract last dims.
    a = jnp.einsum("bnd,bmd->bnm", q, k, preferred_element_type=jnp.float32)

    if not scale_q:
        a = a * scale

    a_ref[...] = a.astype(a_ref.dtype)
    v_ref[...] = v.reshape(bt, n, h).astype(v_ref.dtype)


def _pick_batch_tile(bs, n, h, hp, budget_bytes=8 * 1024 * 1024):
    """Largest divisor of bs whose per-step VMEM footprint fits the budget."""
    per_b = 4 * (2 * n * h          # x block (double-buffered)
                 + 2 * n * n        # A block (double-buffered)
                 + 2 * n * h        # V block (double-buffered)
                 + n * 3 * hp)      # fused qkv intermediate
    bt = max(1, min(bs, budget_bytes // max(per_b, 1)))
    while bs % bt != 0:
        bt -= 1
    return bt


def semantic_attention_defum(x, wq, wk, wv, bq, bk, bv):
    """SemanticAttentionDeFUM forward.

    x        : (BS, N, H)
    wq/wk/wv : (H, H)  nn.Linear weights already transposed to (in, out)
    bq/bk/bv : (1, H)

    Returns (A, V):
      A = (x@Wq + bq) @ (x@Wk + bk)^T / sqrt(H)   -> (BS, N, N)
      V =  x@Wv + bv                              -> (BS, N, H)
    """
    bs, n, h = x.shape
    dt = jnp.float32
    hp = _round_up(h, 128)          # lane-align each fused-projection segment
    scale = 1.0 / math.sqrt(h)
    scale_q = n > hp                # scale Q only if it is the smaller operand

    # Fuse + zero-pad the three projections: one MXU push, tile-aligned slices.
    w_qkv = jnp.zeros((h, 3 * hp), dt)
    w_qkv = w_qkv.at[:, 0:h].set(wq.astype(dt))
    w_qkv = w_qkv.at[:, hp:hp + h].set(wk.astype(dt))
    w_qkv = w_qkv.at[:, 2 * hp:2 * hp + h].set(wv.astype(dt))
    b_qkv = jnp.zeros((1, 3 * hp), dt)
    b_qkv = b_qkv.at[:, 0:h].set(bq.reshape(1, h).astype(dt))
    b_qkv = b_qkv.at[:, hp:hp + h].set(bk.reshape(1, h).astype(dt))
    b_qkv = b_qkv.at[:, 2 * hp:2 * hp + h].set(bv.reshape(1, h).astype(dt))

    # Flatten batch into the matmul M dimension (wrapper reshape is layout
    # plumbing, not compute).
    x_flat = x.reshape(bs * n, h).astype(dt)

    bt = _pick_batch_tile(bs, n, h, hp)
    grid = (bs // bt,)

    kernel = functools.partial(
        _semantic_attention_kernel,
        bt=bt, n=n, h=h, hp=hp, scale=scale, scale_q=scale_q)

    flops = bs * (2 * n * h * 3 * hp + 2 * n * n * hp)
    bytes_accessed = 4 * (bs * n * h + h * 3 * hp + 3 * hp
                          + bs * n * n + bs * n * h)

    a_out, v_out = pl.pallas_call(
        kernel,
        out_shape=(
            jax.ShapeDtypeStruct((bs, n, n), dt),
            jax.ShapeDtypeStruct((bs, n, h), dt),
        ),
        grid_spec=pltpu.PrefetchScalarGridSpec(
            num_scalar_prefetch=0,
            grid=grid,
            in_specs=[
                pl.BlockSpec((bt * n, h), lambda b: (b, 0)),      # x (flattened)
                pl.BlockSpec((h, 3 * hp), lambda b: (0, 0)),      # fused W_qkv
                pl.BlockSpec((1, 3 * hp), lambda b: (0, 0)),      # fused b_qkv
            ],
            out_specs=[
                pl.BlockSpec((bt, n, n), lambda b: (b, 0, 0)),    # A
                pl.BlockSpec((bt, n, h), lambda b: (b, 0, 0)),    # V
            ],
        ),
        compiler_params=pltpu.CompilerParams(
            dimension_semantics=("parallel",)),
        cost_estimate=pl.CostEstimate(
            flops=flops, transcendentals=0, bytes_accessed=bytes_accessed),
    )(x_flat, w_qkv, b_qkv)

    return a_out, v_out


def reference(x, wq, wk, wv, bq, bk, bv):
    h = x.shape[-1]
    q = jnp.einsum("bnh,hk->bnk", x, wq) + bq
    k = jnp.einsum("bnh,hk->bnk", x, wk) + bk
    v = jnp.einsum("bnh,hk->bnk", x, wv) + bv
    a = jnp.einsum("bnk,bmk->bnm", q, k) / math.sqrt(h)
    return a, v


if __name__ == "__main__":
    BS, N, H = 2, 8, 32   # batch, num_obj + num_ocr tokens, hidden_size

    key = jax.random.PRNGKey(0)
    kx, kq, kk, kv, kbq, kbk, kbv = jax.random.split(key, 7)

    x = jax.random.normal(kx, (BS, N, H), dtype=jnp.float32)

    # nn.Linear(H, H) params; stored pre-transposed as (in, out).
    bound = 1.0 / math.sqrt(H)
    wq = jax.random.uniform(kq, (H, H), jnp.float32, -bound, bound)
    wk = jax.random.uniform(kk, (H, H), jnp.float32, -bound, bound)
    wv = jax.random.uniform(kv, (H, H), jnp.float32, -bound, bound)
    bq = jax.random.uniform(kbq, (1, H), jnp.float32, -bound, bound)
    bk = jax.random.uniform(kbk, (1, H), jnp.float32, -bound, bound)
    bv = jax.random.uniform(kbv, (1, H), jnp.float32, -bound, bound)

    a_out, v_out = semantic_attention_defum(x, wq, wk, wv, bq, bk, bv)
    jax.block_until_ready((a_out, v_out))

    a_ref, v_ref = reference(x, wq, wk, wv, bq, bk, bv)
    assert jnp.allclose(a_out, a_ref, atol=1e-4, rtol=1e-4)
    assert jnp.allclose(v_out, v_ref, atol=1e-4, rtol=1e-4)

    print("KERNEL_OK")
</pallas_src>

<mosaic_0001>
module attributes {stable_mosaic.version = 11 : i64} {
  func.func @_semantic_attention_kernel(%arg0: i32, %arg1: memref<16x32xf32, #tpu.memory_space<vmem>>, %arg2: memref<32x384xf32, #tpu.memory_space<vmem>>, %arg3: memref<1x384xf32, #tpu.memory_space<vmem>>, %arg4: memref<2x8x8xf32, #tpu.memory_space<vmem>>, %arg5: memref<2x8x32xf32, #tpu.memory_space<vmem>>) attributes {dimension_semantics = [#tpu.dimension_semantics<parallel>], iteration_bounds = array<i64: 1>, scalar_prefetch = 0 : i64, scratch_operands = 0 : i64, tpu.core_type = #tpu.core_type<tc>, window_params = [{transform_indices = @transform_0, window_bounds = array<i64: 16, 32>}, {pipeline_mode = #tpu.pipeline_mode<synchronous>, transform_indices = @transform_1, window_bounds = array<i64: 32, 384>}, {pipeline_mode = #tpu.pipeline_mode<synchronous>, transform_indices = @transform_2, window_bounds = array<i64: 1, 384>}, {transform_indices = @transform_3, window_bounds = array<i64: 2, 8, 8>}, {transform_indices = @transform_4, window_bounds = array<i64: 2, 8, 32>}]} {
    %c0 = arith.constant 0 : index
    %c0_0 = arith.constant 0 : index
    %0 = vector.load %arg1[%c0, %c0_0] : memref<16x32xf32, #tpu.memory_space<vmem>>, vector<16x32xf32>
    %c0_1 = arith.constant 0 : index
    %c0_2 = arith.constant 0 : index
    %1 = vector.load %arg2[%c0_1, %c0_2] : memref<32x384xf32, #tpu.memory_space<vmem>>, vector<32x384xf32>
    %cst = arith.constant dense<0.000000e+00> : vector<16x384xf32>
    %2 = tpu.matmul %0, %1, %cst {dimension_numbers = #tpu.dot_dimension_numbers<[1], [0], [0], [1], [0, 0, 1, 1], [], []>} : vector<16x32xf32>, vector<32x384xf32>, vector<16x384xf32> -> vector<16x384xf32>
    %c0_3 = arith.constant 0 : index
    %c0_4 = arith.constant 0 : index
    %3 = vector.load %arg3[%c0_3, %c0_4] : memref<1x384xf32, #tpu.memory_space<vmem>>, vector<1x384xf32>
    %4 = vector.broadcast %3 : vector<1x384xf32> to vector<16x384xf32>
    %5 = arith.addf %2, %4 : vector<16x384xf32>
    %6 = vector.extract_strided_slice %5 {offsets = [0, 0], sizes = [16, 128], strides = [1, 1]} : vector<16x384xf32> to vector<16x128xf32>
    %7 = vector.shape_cast %6 : vector<16x128xf32> to vector<2x8x128xf32>
    %8 = vector.extract_strided_slice %5 {offsets = [0, 128], sizes = [16, 128], strides = [1, 1]} : vector<16x384xf32> to vector<16x128xf32>
    %9 = vector.shape_cast %8 : vector<16x128xf32> to vector<2x8x128xf32>
    %10 = vector.extract_strided_slice %5 {offsets = [0, 256], sizes = [16, 32], strides = [1, 1]} : vector<16x384xf32> to vector<16x32xf32>
    "tpu.trace_start"() <{level = 10 : i32, message = "bnd,bmd->bnm"}> : () -> ()
    %cst_5 = arith.constant dense<0.000000e+00> : vector<2x8x8xf32>
    %11 = tpu.matmul %7, %9, %cst_5 {dimension_numbers = #tpu.dot_dimension_numbers<[2], [2], [1], [1], [0, 0, 0, 1, 1, 1], [0], [0]>} : vector<2x8x128xf32>, vector<2x8x128xf32>, vector<2x8x8xf32> -> vector<2x8x8xf32>
    "tpu.trace_stop"() : () -> ()
    %cst_6 = arith.constant 0.176776692 : f32
    %12 = vector.broadcast %cst_6 : f32 to vector<2x8x8xf32>
    %13 = arith.mulf %11, %12 : vector<2x8x8xf32>
    %c0_7 = arith.constant 0 : index
    %c0_8 = arith.constant 0 : index
    %c0_9 = arith.constant 0 : index
    %14 = vector.load %arg4[%c0_7, %c0_8, %c0_9] : memref<2x8x8xf32, #tpu.memory_space<vmem>>, vector<2x8x8xf32>
    tpu.vector_store %arg4[%c0_7, %c0_8, %c0_9], %13 {strides = array<i32>} : memref<2x8x8xf32, #tpu.memory_space<vmem>>, vector<2x8x8xf32>,
    %15 = vector.shape_cast %10 : vector<16x32xf32> to vector<2x8x32xf32>
    %c0_10 = arith.constant 0 : index
    %c0_11 = arith.constant 0 : index
    %c0_12 = arith.constant 0 : index
    %16 = vector.load %arg5[%c0_10, %c0_11, %c0_12] : memref<2x8x32xf32, #tpu.memory_space<vmem>>, vector<2x8x32xf32>
    tpu.vector_store %arg5[%c0_10, %c0_11, %c0_12], %15 {strides = array<i32>} : memref<2x8x32xf32, #tpu.memory_space<vmem>>, vector<2x8x32xf32>,
    return
  }
  func.func @transform_0(%arg0: i32) -> (i32, i32) {
    %c0_i32 = arith.constant 0 : i32
    %c0_i32_0 = arith.constant 0 : i32
    return %arg0, %c0_i32 : i32, i32
  }
  func.func @transform_1(%arg0: i32) -> (i32, i32) {
    %c0_i32 = arith.constant 0 : i32
    %c0_i32_0 = arith.constant 0 : i32
    %c0_i32_1 = arith.constant 0 : i32
    return %c0_i32, %c0_i32_0 : i32, i32
  }
  func.func @transform_2(%arg0: i32) -> (i32, i32) {
    %c0_i32 = arith.constant 0 : i32
    %c0_i32_0 = arith.constant 0 : i32
    %c0_i32_1 = arith.constant 0 : i32
    return %c0_i32, %c0_i32_0 : i32, i32
  }
  func.func @transform_3(%arg0: i32) -> (i32, i32, i32) {
    %c0_i32 = arith.constant 0 : i32
    %c0_i32_0 = arith.constant 0 : i32
    %c0_i32_1 = arith.constant 0 : i32
    return %arg0, %c0_i32, %c0_i32_0 : i32, i32, i32
  }
  func.func @transform_4(%arg0: i32) -> (i32, i32, i32) {
    %c0_i32 = arith.constant 0 : i32
    %c0_i32_0 = arith.constant 0 : i32
    %c0_i32_1 = arith.constant 0 : i32
    return %arg0, %c0_i32, %c0_i32_0 : i32, i32, i32
  }
}

</mosaic_0001>

<llo_original>
// kernel: tpu_custom_call.1
$region0: #{tpu_custom_call.1}
  #allocation0 [shape = 'u32[]', space=smem, size = 0x4, offset = 0x4, fixed_abs, tag = 'smem constant byte address 0x4 - core index']
  #allocation1 [shape = 'u32[144,128]{1,0:T(1,128)}', space=vmem, size = 0x12000, scoped, tag = 'internal scratch']
  %s0 = inlined_call_operand.hbm [shape: f32[16,32], index: 0, kind: input, shape index: {}]
  %s1 = inlined_call_operand.hbm [shape: f32[32,384], index: 1, kind: input, shape index: {}]
  %s2 = inlined_call_operand.vmem [shape: f32[1,384], index: 2, kind: input, shape index: {}]
  %s3 = inlined_call_operand.hbm [shape: f32[2,8,8], index: 3, kind: output, shape index: {0}]
  %s4 = inlined_call_operand.hbm [shape: f32[2,8,32], index: 4, kind: output, shape index: {1}]
  %5 = xla_tuple %s3, %s4
  %s6 = sld [smem:[#allocation0]]
  $region38: #{tpu_custom_call.1} parent=0
    _
  %s8 = ssub.s32 1, %s6
  %s9 = scalar_select 0, %s8, %s6
  $region1: #{tpu_custom_call.1} parent=0
    #allocation2 [shape = 'u8[8192]{0}', space=vmem, size = 0x2000, scoped, tag = 'input window, operand 0, single buffered']
    #allocation3 [shape = 's32[1]{0}', space=sflag, size = 0x4, scoped, tag = 'scoped memory for tpu_custom_call.1']
    #allocation4 [shape = 's32[1]{0}', space=sflag, size = 0x4, scoped, tag = 'scoped memory for tpu_custom_call.1']
    #allocation5 [shape = 'u8[49152]{0}', space=vmem, size = 0xc000, scoped, tag = 'input window, operand 1, single buffered']
    #allocation6 [shape = 's32[1]{0}', space=sflag, size = 0x4, scoped, tag = 'scoped memory for tpu_custom_call.1']
    #allocation7 [shape = 'u8[8192]{0}', space=vmem, size = 0x2000, scoped, tag = 'output window, operand 0, single buffered']
    #allocation8 [shape = 'u8[8192]{0}', space=vmem, size = 0x2000, scoped, tag = 'output window, operand 1, single buffered']
    #allocation9 [shape = 's32[1]{0}', space=sflag, size = 0x4, scoped, tag = 'scoped memory for tpu_custom_call.1']
    %10 = vsyncpa [#allocation3], 0
    %11 = vsyncpa [#allocation6], 0
    %12 = vsyncpa [#allocation4], 0
    %13 = vsyncpa [#allocation9], 0
    // Predicated region
    $region2: #{tpu_custom_call.1} parent=1 // pred_check
      _
    $region3: #{tpu_custom_call.1} parent=1 // pred_check_branch
      %15 = sbr.rel (0) target = $region5
    $region4: #{tpu_custom_call.1} parent=1 // pred_region
      %s17 = ssub.s32 256, 256
      %18 = vsyncadd [#allocation3], %s17
      %s19 = sshll.u32 [#allocation2], 4
      %s20 = int_to_ptr.vmem [resolvable:$true] %s19
      %25 = dma.hbm_to_vmem [thread:$0]  %s0, 256, %s20, [#allocation3], 128, 128, 8
    $region5: #{tpu_custom_call.1} parent=1 // pred_fallthru
      _
    // Predicated region
    $region6: #{tpu_custom_call.1} parent=1 // pred_check
      _
    $region7: #{tpu_custom_call.1} parent=1 // pred_check_branch
      %27 = sbr.rel (0) target = $region9
    $region8: #{tpu_custom_call.1} parent=1 // pred_region
      %s29 = ssub.s32 1536, 1536
      %30 = vsyncadd [#allocation6], %s29
      %s31 = sshll.u32 [#allocation5], 4
      %s32 = int_to_ptr.vmem [resolvable:$true] %s31
      %37 = dma.hbm_to_vmem [thread:$0]  %s1, 1536, %s32, [#allocation6], 384, 384, 24
    $region9: #{tpu_custom_call.1} parent=1 // pred_fallthru
      _
    // Predicated region
    $region10: #{tpu_custom_call.1} parent=1 // pred_check
      _
    $region11: #{tpu_custom_call.1} parent=1 // pred_check_branch
      %39 = sbr.rel (0) target = $region13
    $region12: #{tpu_custom_call.1} parent=1 // pred_region
      _
    $region13: #{tpu_custom_call.1} parent=1 // pred_fallthru
      _
    // Predicated region
    $region14: #{tpu_custom_call.1} parent=1 // pred_check
      _
    $region15: #{tpu_custom_call.1} parent=1 // pred_check_branch
      %41 = sbr.rel (0) target = $region17
    $region16: #{tpu_custom_call.1} parent=1 // pred_region
      %42 = dma.done [#allocation3], 256
    $region17: #{tpu_custom_call.1} parent=1 // pred_fallthru
      _
    // Predicated region
    $region18: #{tpu_custom_call.1} parent=1 // pred_check
      _
    $region19: #{tpu_custom_call.1} parent=1 // pred_check_branch
      %44 = sbr.rel (0) target = $region21
    $region20: #{tpu_custom_call.1} parent=1 // pred_region
      %45 = dma.done [#allocation6], 1536
    $region21: #{tpu_custom_call.1} parent=1 // pred_fallthru
      _
    %v46 = vld [vmem:[#allocation2] sm:$0xff]
    %v47 = vld [vmem:[#allocation2 + $0x8] sm:$0xff]
    %v48 = vld [vmem:[#allocation5] sm:$0xff]
    %v49 = vld [vmem:[#allocation5 + $0x8] sm:$0xff]
    %v50 = vld [vmem:[#allocation5 + $0x10] sm:$0xff]
    %v51 = vld [vmem:[#allocation5 + $0x18] sm:$0xff]
    %v52 = vld [vmem:[#allocation5 + $0x20] sm:$0xff]
    %v53 = vld [vmem:[#allocation5 + $0x28] sm:$0xff]
    %v54 = vld [vmem:[#allocation5 + $0x30] sm:$0xff]
    %v55 = vld [vmem:[#allocation5 + $0x38] sm:$0xff]
    %v56 = vld [vmem:[#allocation5 + $0x40] sm:$0xff]
    %v57 = vld [vmem:[#allocation5 + $0x48] sm:$0xff]
    %v58 = vld [vmem:[#allocation5 + $0x50] sm:$0xff]
    %v59 = vld [vmem:[#allocation5 + $0x58] sm:$0xff]
    %v60 = vld [vmem:[%s2] sm:$0x7]
    %v62 = vlaneseq
    %v63 = vshrl.u32 %v62, 7
    %v64 = vsub.s32 0, %v63
    %v65 = vrot.slane %v60, %v64
    %v66 = vlaneseq
    %v67 = vshrl.u32 %v66, 7
    %v68 = vsub.s32 1, %v67
    %v69 = vrot.slane %v60, %v68
    %v70 = vlaneseq
    %v71 = vshrl.u32 %v70, 7
    %v72 = vsub.s32 2, %v71
    %v73 = vrot.slane %v60, %v72
    %vm77 = vcmask 261120
    %v79 = vsel %vm77, %v46, 0
    %v82 = vsel %vm77, %v47, 0
    %84 = vmatprep.subr.mxu0 %v49
    %85 = vmatpush1.msra.mxu0 %v48
    %86 = vmatprep.subr.mxu0 %v52
    %87 = vmatpush1.msra.mxu0 %v51
    %88 = vmatprep.subr.mxu0 %v55
    %89 = vmatpush1.msra.mxu0 %v54
    %90 = vmatprep.subr.mxu0 %v58
    %91 = vmatpush1.msra.mxu0 %v57
    %92 = vmatprep.subr.mxu0 0.0
    %93 = vmatpush1.msra.mxu0 0.0
    %94 = vmatprep.subr.mxu0 0.0
    %95 = vmatpush1.msra.mxu0 0.0
    %96 = vmatprep.subr.mxu0 0.0
    %97 = vmatpush1.msra.mxu0 0.0
    %98 = vmatprep.subr.mxu0 0.0
    %99 = vmatpush1.msra.mxu0 0.0
    %100 = vmatprep.subr.mxu0 0.0
    %101 = vmatpush1.msra.mxu0 0.0
    %102 = vmatprep.subr.mxu0 0.0
    %103 = vmatpush1.msra.mxu0 0.0
    %104 = vmatprep.subr.mxu0 0.0
    %105 = vmatpush1.msra.mxu0 0.0
    %106 = vmatprep.subr.mxu0 0.0
    %107 = vmatpush1.msra.mxu0 0.0
    %108 = vmatprep.subr.mxu0 0.0
    %109 = vmatpush1.msra.mxu0 0.0
    %110 = vmatprep.subr.mxu0 0.0
    %111 = vmatpush1.msra.mxu0 0.0
    %112 = vmatprep.subr.mxu0 0.0
    %113 = vmatpush1.msra.mxu0 0.0
    %114 = vmatprep.subr.mxu0 0.0
    %115 = vmatpush1.msra.mxu0 0.0
    %116 = vmatprep.subr.mxu0 0.0
    %117 = vmatpush1.msra.mxu0 0.0
    %118 = vmatprep.subr.mxu0 0.0
    %119 = vmatpush1.msra.mxu0 0.0
    %120 = vmatprep.subr.mxu0 0.0
    %121 = vmatpush1.msra.mxu0 0.0
    %122 = vmatprep.subr.mxu0 0.0
    %123 = vmatpush1.msra.mxu0 0.0
    %124 = vmatprep.subr.mxu0 0.0
    %125 = vmatpush1.msra.mxu0 0.0
    %126 = vmatprep.subr.mxu0 0.0
    %127 = vmatpush1.msra.mxu0 0.0
    %128 = vmatprep.subr.mxu0 0.0
    %129 = vmatpush1.msra.mxu0 0.0
    %130 = vmatprep.subr.mxu0 0.0
    %131 = vmatpush1.msra.mxu0 0.0
    %132 = vmatprep.subr.mxu0 0.0
    %133 = vmatpush1.msra.mxu0 0.0
    %134 = vmatprep.subr.mxu0 0.0
    %135 = vmatpush1.msra.mxu0 0.0
    %136 = vmatprep.subr.mxu0 0.0
    %137 = vmatpush1.msra.mxu0 0.0
    %138 = vmatprep.subr.mxu0 0.0
    %139 = vmatpush1.msra.mxu0 0.0
    %140 = vmatprep.subr.mxu0 0.0
    %141 = vmatpush1.msra.mxu0 0.0
    %142 = vmatprep.subr.mxu0 0.0
    %143 = vmatpush1.msra.mxu0 0.0
    %144 = vmatprep.subr.mxu0 0.0
    %145 = vmatpush1.msra.mxu0 0.0
    %146 = vmatprep.subr.mxu0 0.0
    %147 = vmatpush1.msra.mxu0 0.0
    %148 = vmatprep.mubr.f32.mxu0 0.0
    %149 = vmatmul.mubr.f32.gmra.mrb[0].mxu0 %v79
    %v150 = vpop.f32.mrb[0].mxu0
    %v151 = vadd.f32 %v65, %v150
    %v152 = vpop.f32.mrb[0].mxu0
    %v153 = vadd.f32 %v69, %v152
    %154 = vmatprep.mubr.f32.mxu0 0.0
    %155 = vmatmul.mubr.f32.gmra.mrb[0].mxu0 %v82
    %v156 = vpop.f32.mrb[0].mxu0
    %v157 = vadd.f32 %v65, %v156
    %v158 = vpop.f32.mrb[0].mxu0
    %v159 = vadd.f32 %v69, %v158
    %160 = vdwg.mxu0
    %161 = vmatprep.subr.mxu0 0.0
    %162 = vmatpush1.msra.mxu0 %v50
    %163 = vmatprep.subr.mxu0 0.0
    %164 = vmatpush1.msra.mxu0 %v53
    %165 = vmatprep.subr.mxu0 0.0
    %166 = vmatpush1.msra.mxu0 %v56
    %167 = vmatprep.subr.mxu0 0.0
    %168 = vmatpush1.msra.mxu0 %v59
    %169 = vmatprep.subr.mxu0 0.0
    %170 = vmatpush1.msra.mxu0 0.0
    %171 = vmatprep.subr.mxu0 0.0
    %172 = vmatpush1.msra.mxu0 0.0
    %173 = vmatprep.subr.mxu0 0.0
    %174 = vmatpush1.msra.mxu0 0.0
    %175 = vmatprep.subr.mxu0 0.0
    %176 = vmatpush1.msra.mxu0 0.0
    %177 = vmatprep.subr.mxu0 0.0
    %178 = vmatpush1.msra.mxu0 0.0
    %179 = vmatprep.subr.mxu0 0.0
    %180 = vmatpush1.msra.mxu0 0.0
    %181 = vmatprep.subr.mxu0 0.0
    %182 = vmatpush1.msra.mxu0 0.0
    %183 = vmatprep.subr.mxu0 0.0
    %184 = vmatpush1.msra.mxu0 0.0
    %185 = vmatprep.subr.mxu0 0.0
    %186 = vmatpush1.msra.mxu0 0.0
    %187 = vmatprep.subr.mxu0 0.0
    %188 = vmatpush1.msra.mxu0 0.0
    %189 = vmatprep.subr.mxu0 0.0
    %190 = vmatpush1.msra.mxu0 0.0
    %191 = vmatprep.subr.mxu0 0.0
    %192 = vmatpush1.msra.mxu0 0.0
    %193 = vmatprep.subr.mxu0 0.0
    %194 = vmatpush1.msra.mxu0 0.0
    %195 = vmatprep.subr.mxu0 0.0
    %196 = vmatpush1.msra.mxu0 0.0
    %197 = vmatprep.subr.mxu0 0.0
    %198 = vmatpush1.msra.mxu0 0.0
    %199 = vmatprep.subr.mxu0 0.0
    %200 = vmatpush1.msra.mxu0 0.0
    %201 = vmatprep.subr.mxu0 0.0
    %202 = vmatpush1.msra.mxu0 0.0
    %203 = vmatprep.subr.mxu0 0.0
    %204 = vmatpush1.msra.mxu0 0.0
    %205 = vmatprep.subr.mxu0 0.0
    %206 = vmatpush1.msra.mxu0 0.0
    %207 = vmatprep.subr.mxu0 0.0
    %208 = vmatpush1.msra.mxu0 0.0
    %209 = vmatprep.subr.mxu0 0.0
    %210 = vmatpush1.msra.mxu0 0.0
    %211 = vmatprep.subr.mxu0 0.0
    %212 = vmatpush1.msra.mxu0 0.0
    %213 = vmatprep.subr.mxu0 0.0
    %214 = vmatpush1.msra.mxu0 0.0
    %215 = vmatprep.subr.mxu0 0.0
    %216 = vmatpush1.msra.mxu0 0.0
    %217 = vmatprep.subr.mxu0 0.0
    %218 = vmatpush1.msra.mxu0 0.0
    %219 = vmatprep.subr.mxu0 0.0
    %220 = vmatpush1.msra.mxu0 0.0
    %221 = vmatprep.subr.mxu0 0.0
    %222 = vmatpush1.msra.mxu0 0.0
    %223 = vmatprep.subr.mxu0 0.0
    %224 = vmatpush1.msra.mxu0 0.0
    %225 = vmatprep.mubr.f32.mxu0 0.0
    %226 = vmatmul.mubr.f32.gmra.mrb[0].mxu0 %v79
    %v227 = vpop.f32.mrb[0].mxu0
    %v228 = vadd.f32 %v73, %v227
    %v229 = vpop.f32.mrb[0].mxu0
    %230 = vmatprep.mubr.f32.mxu0 0.0
    %231 = vmatmul.mubr.f32.gmra.mrb[0].mxu0 %v82
    %v232 = vpop.f32.mrb[0].mxu0
    %v233 = vadd.f32 %v73, %v232
    %v234 = vpop.f32.mrb[0].mxu0
    %235 = vdwg.mxu0
    %236 = vmatprep.subr.mxu0 0.0
    %237 = vmatpush1.xpose.msra.mxu0 %v153
    %238 = vmatprep.subr.mxu0 0.0
    %239 = vmatpush1.xpose.msra.mxu0 0.0
    %240 = vmatprep.subr.mxu0 0.0
    %241 = vmatpush1.xpose.msra.mxu0 0.0
    %242 = vmatprep.subr.mxu0 0.0
    %243 = vmatpush1.xpose.msra.mxu0 0.0
    %244 = vmatprep.subr.mxu0 0.0
    %245 = vmatpush1.xpose.msra.mxu0 0.0
    %246 = vmatprep.subr.mxu0 0.0
    %247 = vmatpush1.xpose.msra.mxu0 0.0
    %248 = vmatprep.subr.mxu0 0.0
    %249 = vmatpush1.xpose.msra.mxu0 0.0
    %250 = vmatprep.subr.mxu0 0.0
    %251 = vmatpush1.xpose.msra.mxu0 0.0
    %252 = vmatprep.subr.mxu0 0.0
    %253 = vmatpush1.xpose.msra.mxu0 0.0
    %254 = vmatprep.subr.mxu0 0.0
    %255 = vmatpush1.xpose.msra.mxu0 0.0
    %256 = vmatprep.subr.mxu0 0.0
    %257 = vmatpush1.xpose.msra.mxu0 0.0
    %258 = vmatprep.subr.mxu0 0.0
    %259 = vmatpush1.xpose.msra.mxu0 0.0
    %260 = vmatprep.subr.mxu0 0.0
    %261 = vmatpush1.xpose.msra.mxu0 0.0
    %262 = vmatprep.subr.mxu0 0.0
    %263 = vmatpush1.xpose.msra.mxu0 0.0
    %264 = vmatprep.subr.mxu0 0.0
    %265 = vmatpush1.xpose.msra.mxu0 0.0
    %266 = vmatprep.subr.mxu0 0.0
    %267 = vmatpush1.xpose.msra.mxu0 0.0
    %268 = vmatprep.subr.mxu0 0.0
    %269 = vmatpush1.xpose.msra.mxu0 0.0
    %270 = vmatprep.subr.mxu0 0.0
    %271 = vmatpush1.xpose.msra.mxu0 0.0
    %272 = vmatprep.subr.mxu0 0.0
    %273 = vmatpush1.xpose.msra.mxu0 0.0
    %274 = vmatprep.subr.mxu0 0.0
    %275 = vmatpush1.xpose.msra.mxu0 0.0
    %276 = vmatprep.subr.mxu0 0.0
    %277 = vmatpush1.xpose.msra.mxu0 0.0
    %278 = vmatprep.subr.mxu0 0.0
    %279 = vmatpush1.xpose.msra.mxu0 0.0
    %280 = vmatprep.subr.mxu0 0.0
    %281 = vmatpush1.xpose.msra.mxu0 0.0
    %282 = vmatprep.subr.mxu0 0.0
    %283 = vmatpush1.xpose.msra.mxu0 0.0
    %284 = vmatprep.subr.mxu0 0.0
    %285 = vmatpush1.xpose.msra.mxu0 0.0
    %286 = vmatprep.subr.mxu0 0.0
    %287 = vmatpush1.xpose.msra.mxu0 0.0
    %288 = vmatprep.subr.mxu0 0.0
    %289 = vmatpush1.xpose.msra.mxu0 0.0
    %290 = vmatprep.subr.mxu0 0.0
    %291 = vmatpush1.xpose.msra.mxu0 0.0
    %292 = vmatprep.subr.mxu0 0.0
    %293 = vmatpush1.xpose.msra.mxu0 0.0
    %294 = vmatprep.subr.mxu0 0.0
    %295 = vmatpush1.xpose.msra.mxu0 0.0
    %296 = vmatprep.subr.mxu0 0.0
    %297 = vmatpush1.xpose.msra.mxu0 0.0
    %298 = vmatprep.subr.mxu0 0.0
    %299 = vmatpush1.xpose.msra.mxu0 0.0
    %300 = vmatprep.mubr.f32.mxu0 0.0
    %301 = vmatmul.mubr.f32.gmra.mrb[0].mxu0 %v151
    %v302 = vpop.f32.mrb[0].mxu0
    %v303 = vadd.f32 0.0, %v302
    %v304 = vpop.f32.mrb[0].mxu0
    %305 = vdwg.mxu0
    %306 = vmatprep.subr.mxu0 0.0
    %307 = vmatpush1.xpose.msra.mxu0 %v159
    %308 = vmatprep.subr.mxu0 0.0
    %309 = vmatpush1.xpose.msra.mxu0 0.0
    %310 = vmatprep.subr.mxu0 0.0
    %311 = vmatpush1.xpose.msra.mxu0 0.0
    %312 = vmatprep.subr.mxu0 0.0
    %313 = vmatpush1.xpose.msra.mxu0 0.0
    %314 = vmatprep.subr.mxu0 0.0
    %315 = vmatpush1.xpose.msra.mxu0 0.0
    %316 = vmatprep.subr.mxu0 0.0
    %317 = vmatpush1.xpose.msra.mxu0 0.0
    %318 = vmatprep.subr.mxu0 0.0
    %319 = vmatpush1.xpose.msra.mxu0 0.0
    %320 = vmatprep.subr.mxu0 0.0
    %321 = vmatpush1.xpose.msra.mxu0 0.0
    %322 = vmatprep.subr.mxu0 0.0
    %323 = vmatpush1.xpose.msra.mxu0 0.0
    %324 = vmatprep.subr.mxu0 0.0
    %325 = vmatpush1.xpose.msra.mxu0 0.0
    %326 = vmatprep.subr.mxu0 0.0
    %327 = vmatpush1.xpose.msra.mxu0 0.0
    %328 = vmatprep.subr.mxu0 0.0
    %329 = vmatpush1.xpose.msra.mxu0 0.0
    %330 = vmatprep.subr.mxu0 0.0
    %331 = vmatpush1.xpose.msra.mxu0 0.0
    %332 = vmatprep.subr.mxu0 0.0
    %333 = vmatpush1.xpose.msra.mxu0 0.0
    %334 = vmatprep.subr.mxu0 0.0
    %335 = vmatpush1.xpose.msra.mxu0 0.0
    %336 = vmatprep.subr.mxu0 0.0
    %337 = vmatpush1.xpose.msra.mxu0 0.0
    %338 = vmatprep.subr.mxu0 0.0
    %339 = vmatpush1.xpose.msra.mxu0 0.0
    %340 = vmatprep.subr.mxu0 0.0
    %341 = vmatpush1.xpose.msra.mxu0 0.0
    %342 = vmatprep.subr.mxu0 0.0
    %343 = vmatpush1.xpose.msra.mxu0 0.0
    %344 = vmatprep.subr.mxu0 0.0
    %345 = vmatpush1.xpose.msra.mxu0 0.0
    %346 = vmatprep.subr.mxu0 0.0
    %347 = vmatpush1.xpose.msra.mxu0 0.0
    %348 = vmatprep.subr.mxu0 0.0
    %349 = vmatpush1.xpose.msra.mxu0 0.0
    %350 = vmatprep.subr.mxu0 0.0
    %351 = vmatpush1.xpose.msra.mxu0 0.0
    %352 = vmatprep.subr.mxu0 0.0
    %353 = vmatpush1.xpose.msra.mxu0 0.0
    %354 = vmatprep.subr.mxu0 0.0
    %355 = vmatpush1.xpose.msra.mxu0 0.0
    %356 = vmatprep.subr.mxu0 0.0
    %357 = vmatpush1.xpose.msra.mxu0 0.0
    %358 = vmatprep.subr.mxu0 0.0
    %359 = vmatpush1.xpose.msra.mxu0 0.0
    %360 = vmatprep.subr.mxu0 0.0
    %361 = vmatpush1.xpose.msra.mxu0 0.0
    %362 = vmatprep.subr.mxu0 0.0
    %363 = vmatpush1.xpose.msra.mxu0 0.0
    %364 = vmatprep.subr.mxu0 0.0
    %365 = vmatpush1.xpose.msra.mxu0 0.0
    %366 = vmatprep.subr.mxu0 0.0
    %367 = vmatpush1.xpose.msra.mxu0 0.0
    %368 = vmatprep.subr.mxu0 0.0
    %369 = vmatpush1.xpose.msra.mxu0 0.0
    %370 = vmatprep.mubr.f32.mxu0 0.0
    %371 = vmatmul.mubr.f32.gmra.mrb[0].mxu0 %v157
    %v372 = vpop.f32.mrb[0].mxu0
    %v373 = vadd.f32 0.0, %v372
    %v374 = vpop.f32.mrb[0].mxu0
    %375 = vdwg.mxu0
    %v376 = vmul.f32 %v303, 0.17677669
    %v377 = vmul.f32 %v373, 0.17677669
    %vm378 = vcmask 64512
    %379 = vst.msk [vmem:[#allocation7] sm:$0xff] %vm378, %v376
    %380 = vst.msk [vmem:[#allocation7 + $0x8] sm:$0xff] %vm378, %v377
    %381 = vst.msk [vmem:[#allocation8] sm:$0xff] %vm77, %v228
    %382 = vst.msk [vmem:[#allocation8 + $0x8] sm:$0xff] %vm77, %v233
    // Predicated region
    $region22: #{tpu_custom_call.1} parent=1 // pred_check
      _
    $region23: #{tpu_custom_call.1} parent=1 // pred_check_branch
      %384 = sbr.rel (0) target = $region25
    $region24: #{tpu_custom_call.1} parent=1 // pred_region
      %s386 = ssub.s32 256, 256
      %387 = vsyncadd [#allocation4], %s386
      %s388 = sshll.u32 [#allocation7], 4
      %s389 = int_to_ptr.vmem [resolvable:$true] %s388
      %394 = dma.vmem_to_hbm [thread:$0]  %s389, 256, %s3, [#allocation4], 128, 128, 8
    $region25: #{tpu_custom_call.1} parent=1 // pred_fallthru
      _
    // Predicated region
    $region26: #{tpu_custom_call.1} parent=1 // pred_check
      _
    $region27: #{tpu_custom_call.1} parent=1 // pred_check_branch
      %396 = sbr.rel (0) target = $region29
    $region28: #{tpu_custom_call.1} parent=1 // pred_region
      %s398 = ssub.s32 256, 256
      %399 = vsyncadd [#allocation9], %s398
      %s400 = sshll.u32 [#allocation8], 4
      %s401 = int_to_ptr.vmem [resolvable:$true] %s400
      %406 = dma.vmem_to_hbm [thread:$0]  %s401, 256, %s4, [#allocation9], 128, 128, 8
    $region29: #{tpu_custom_call.1} parent=1 // pred_fallthru
      _
    // Predicated region
    $region30: #{tpu_custom_call.1} parent=1 // pred_check
      _
    $region31: #{tpu_custom_call.1} parent=1 // pred_check_branch
      %408 = sbr.rel (0) target = $region33
    $region32: #{tpu_custom_call.1} parent=1 // pred_region
      %409 = dma.done [#allocation4], 256
    $region33: #{tpu_custom_call.1} parent=1 // pred_fallthru
      _
    // Predicated region
    $region34: #{tpu_custom_call.1} parent=1 // pred_check
      _
    $region35: #{tpu_custom_call.1} parent=1 // pred_check_branch
      %411 = sbr.rel (0) target = $region37
    $region36: #{tpu_custom_call.1} parent=1 // pred_region
      %412 = dma.done [#allocation9], 256
    $region37: #{tpu_custom_call.1} parent=1 // pred_fallthru
      _
    %413 = vsyncpa [#allocation3], 1
    %414 = vsyncpa [#allocation6], 1
    %415 = vsyncpa [#allocation4], 1
    %416 = vsyncpa [#allocation9], 1

</llo_original>
